<compile_context>
chip_gen: v7x
topology: tpu7x:2x2x1
jax: 0.10.0
libtpu: 0.0.40
codegen_flags: <defaults>
</compile_context>

<pallas_src>
import jax
import jax.numpy as jnp
from jax.experimental import pallas as pl
from jax.experimental.pallas import tpu as pltpu


def char_rnn_kernel(x_ref, h0_ref, wih_t_ref, whh_t_ref, bias_ref,
                    wfc_t_ref, bfc_ref, out_ref, hout_ref, hs_scratch):
    """Single invocation: full sequence in VMEM.

    x_ref     : (T, B, H)   embedded inputs
    h0_ref    : (B, H)      initial hidden state
    wih_t_ref : (H, H)      W_ih^T
    whh_t_ref : (H, H)      W_hh^T
    bias_ref  : (1, H)      b_ih + b_hh (folded)
    wfc_t_ref : (H, Vp)     W_fc^T zero-padded to lane-dense Vp
    bfc_ref   : (1, Vp)     b_fc zero-padded
    out_ref   : (T*B, Vp)   logits (padded; sliced in wrapper)
    hout_ref  : (B, H)      final hidden state
    hs_scratch: (T, B, H)   collected hidden states for the batched fc matmul
    """
    T, B, H = x_ref.shape

    # Hoisted input projection: one well-shaped (T*B,H)@(H,H) matmul, off the
    # serial critical path, with both biases folded into a single add.
    x_flat = x_ref[...].reshape(T * B, H)
    p = (jnp.dot(x_flat, wih_t_ref[...], preferred_element_type=jnp.float32)
         + bias_ref[...]).reshape(T, B, H)

    w_hh_t = whh_t_ref[...]              # hoist constant load out of the loop
    h = h0_ref[...]                      # (B, H)

    # Serial recurrence: only h @ W_hh^T + tanh remains on the dependency chain.
    # T is small & static -> fully unrolled straight-line code.
    for t in range(T):
        h = jnp.tanh(p[t] + jnp.dot(h, w_hh_t,
                                    preferred_element_type=jnp.float32))
        hs_scratch[t] = h

    # Final hidden state written explicitly from the live carry.
    hout_ref[...] = h

    # Batched, lane-dense fc projection: one (T*B,H)@(H,Vp) matmul.
    hs_all = hs_scratch[...].reshape(T * B, H)
    out_ref[...] = (jnp.dot(hs_all, wfc_t_ref[...],
                            preferred_element_type=jnp.float32)
                    + bfc_ref[...])


def char_rnn_forward(x_idx, h0, params):
    """x_idx: (T, B) int32 token ids, h0: (1, B, H) float32.

    Returns (logits (T*B, V), hidden (1, B, H)) matching
    `self.fc(output.view(-1, hidden_size)), hidden` in the PyTorch module.
    """
    emb, w_ih, w_hh, b_ih, b_hh, w_fc, b_fc = params
    T, B = x_idx.shape
    H = emb.shape[1]
    V = w_fc.shape[0]
    LANES = 128
    Vp = ((V + LANES - 1) // LANES) * LANES   # lane-dense padded output width

    # Embedding lookup (gather) done in plain JAX as glue.
    x_emb = emb[x_idx].astype(jnp.float32)    # (T, B, H)

    wih_t = w_ih.T.astype(jnp.float32)                       # (H, H)
    whh_t = w_hh.T.astype(jnp.float32)                       # (H, H)
    bias_sum = (b_ih + b_hh).reshape(1, H).astype(jnp.float32)
    # Zero-pad fc weights/bias along V so the logits store is lane-dense.
    wfc_t = jnp.zeros((H, Vp), jnp.float32).at[:, :V].set(w_fc.T)
    bfc_p = jnp.zeros((1, Vp), jnp.float32).at[:, :V].set(b_fc)

    vmem = pl.BlockSpec(memory_space=pltpu.MemorySpace.VMEM)

    out_pad, hout = pl.pallas_call(
        char_rnn_kernel,
        out_shape=(jax.ShapeDtypeStruct((T * B, Vp), jnp.float32),
                   jax.ShapeDtypeStruct((B, H), jnp.float32)),
        in_specs=[vmem, vmem, vmem, vmem, vmem, vmem, vmem],
        out_specs=(vmem, vmem),
        scratch_shapes=[pltpu.VMEM((T, B, H), jnp.float32)],
    )(x_emb, h0[0], wih_t, whh_t, bias_sum, wfc_t, bfc_p)

    logits = out_pad[:, :V]                   # strip lane padding
    return logits, hout[None]                 # hidden as (1, B, H)


def char_rnn_reference(x_idx, h0, params):
    """Pure-JAX reference with identical semantics (for validation)."""
    emb, w_ih, w_hh, b_ih, b_hh, w_fc, b_fc = params
    x_emb = emb[x_idx]                        # (T, B, H)

    def step(h, xt):
        h_new = jnp.tanh(xt @ w_ih.T + b_ih + h @ w_hh.T + b_hh)
        return h_new, h_new

    h_last, hs = jax.lax.scan(step, h0[0], x_emb)
    logits = hs.reshape(-1, emb.shape[1]) @ w_fc.T + b_fc
    return logits, h_last[None]


if __name__ == "__main__":
    # Small, deterministic problem consistent with CharRNN's forward:
    vocab_size = 32       # len(char_to_idx)
    hidden_size = 128
    seq_len = 8
    batch = 8

    key = jax.random.PRNGKey(0)
    ks = jax.random.split(key, 9)

    scale = 1.0 / jnp.sqrt(hidden_size)
    emb   = jax.random.normal(ks[0], (vocab_size, hidden_size), jnp.float32)
    w_ih  = jax.random.uniform(ks[1], (hidden_size, hidden_size), jnp.float32,
                               -scale, scale)
    w_hh  = jax.random.uniform(ks[2], (hidden_size, hidden_size), jnp.float32,
                               -scale, scale)
    b_ih  = jax.random.uniform(ks[3], (hidden_size,), jnp.float32, -scale, scale)
    b_hh  = jax.random.uniform(ks[4], (hidden_size,), jnp.float32, -scale, scale)
    w_fc  = jax.random.uniform(ks[5], (vocab_size, hidden_size), jnp.float32,
                               -scale, scale)
    b_fc  = jax.random.uniform(ks[6], (vocab_size,), jnp.float32, -scale, scale)
    params = (emb, w_ih, w_hh, b_ih, b_hh, w_fc, b_fc)

    x_idx = jax.random.randint(ks[7], (seq_len, batch), 0, vocab_size, jnp.int32)
    h0 = jax.random.normal(ks[8], (1, batch, hidden_size), jnp.float32)

    logits, hidden = jax.block_until_ready(char_rnn_forward(x_idx, h0, params))

    ref_logits, ref_hidden = char_rnn_reference(x_idx, h0, params)
    assert logits.shape == (seq_len * batch, vocab_size)
    assert hidden.shape == (1, batch, hidden_size)
    assert jnp.allclose(logits, ref_logits, atol=1e-4, rtol=1e-4)
    assert jnp.allclose(hidden, ref_hidden, atol=1e-4, rtol=1e-4)

    print("KERNEL_OK")
</pallas_src>

<mosaic_0001>
module attributes {stable_mosaic.version = 11 : i64} {
  func.func @char_rnn_kernel(%arg0: memref<8x8x128xf32, #tpu.memory_space<vmem>>, %arg1: memref<8x128xf32, #tpu.memory_space<vmem>>, %arg2: memref<128x128xf32, #tpu.memory_space<vmem>>, %arg3: memref<128x128xf32, #tpu.memory_space<vmem>>, %arg4: memref<1x128xf32, #tpu.memory_space<vmem>>, %arg5: memref<128x128xf32, #tpu.memory_space<vmem>>, %arg6: memref<1x128xf32, #tpu.memory_space<vmem>>, %arg7: memref<64x128xf32, #tpu.memory_space<vmem>>, %arg8: memref<8x128xf32, #tpu.memory_space<vmem>>, %arg9: memref<8x8x128xf32, #tpu.memory_space<vmem>>) attributes {dimension_semantics = [], scalar_prefetch = 0 : i64, scratch_operands = 1 : i64, tpu.core_type = #tpu.core_type<tc>} {
    %c0 = arith.constant 0 : index
    %c0_0 = arith.constant 0 : index
    %c0_1 = arith.constant 0 : index
    %0 = vector.load %arg0[%c0, %c0_0, %c0_1] : memref<8x8x128xf32, #tpu.memory_space<vmem>>, vector<8x8x128xf32>
    %1 = vector.shape_cast %0 : vector<8x8x128xf32> to vector<64x128xf32>
    %c0_2 = arith.constant 0 : index
    %c0_3 = arith.constant 0 : index
    %2 = vector.load %arg2[%c0_2, %c0_3] : memref<128x128xf32, #tpu.memory_space<vmem>>, vector<128x128xf32>
    %cst = arith.constant dense<0.000000e+00> : vector<64x128xf32>
    %3 = tpu.matmul %1, %2, %cst {dimension_numbers = #tpu.dot_dimension_numbers<[1], [0], [0], [1], [0, 0, 1, 1], [], []>} : vector<64x128xf32>, vector<128x128xf32>, vector<64x128xf32> -> vector<64x128xf32>
    %c0_4 = arith.constant 0 : index
    %c0_5 = arith.constant 0 : index
    %4 = vector.load %arg4[%c0_4, %c0_5] : memref<1x128xf32, #tpu.memory_space<vmem>>, vector<1x128xf32>
    %5 = vector.broadcast %4 : vector<1x128xf32> to vector<64x128xf32>
    %6 = arith.addf %3, %5 : vector<64x128xf32>
    %7 = vector.shape_cast %6 : vector<64x128xf32> to vector<8x8x128xf32>
    %c0_6 = arith.constant 0 : index
    %c0_7 = arith.constant 0 : index
    %8 = vector.load %arg3[%c0_6, %c0_7] : memref<128x128xf32, #tpu.memory_space<vmem>>, vector<128x128xf32>
    %c0_8 = arith.constant 0 : index
    %c0_9 = arith.constant 0 : index
    %9 = vector.load %arg1[%c0_8, %c0_9] : memref<8x128xf32, #tpu.memory_space<vmem>>, vector<8x128xf32>
    %10 = vector.extract_strided_slice %7 {offsets = [0, 0, 0], sizes = [1, 8, 128], strides = [1, 1, 1]} : vector<8x8x128xf32> to vector<1x8x128xf32>
    %11 = vector.shape_cast %10 : vector<1x8x128xf32> to vector<8x128xf32>
    %cst_10 = arith.constant dense<0.000000e+00> : vector<8x128xf32>
    %12 = tpu.matmul %9, %8, %cst_10 {dimension_numbers = #tpu.dot_dimension_numbers<[1], [0], [0], [1], [0, 0, 1, 1], [], []>} : vector<8x128xf32>, vector<128x128xf32>, vector<8x128xf32> -> vector<8x128xf32>
    %13 = arith.addf %11, %12 : vector<8x128xf32>
    %14 = math.tanh %13 : vector<8x128xf32>
    %c0_11 = arith.constant 0 : index
    %c0_12 = arith.constant 0 : index
    %c0_13 = arith.constant 0 : index
    %15 = vector.load %arg9[%c0_11, %c0_12, %c0_13] : memref<8x8x128xf32, #tpu.memory_space<vmem>>, vector<1x8x128xf32>
    %16 = vector.shape_cast %15 : vector<1x8x128xf32> to vector<8x128xf32>
    %17 = vector.shape_cast %14 : vector<8x128xf32> to vector<1x8x128xf32>
    tpu.vector_store %arg9[%c0_11, %c0_12, %c0_13], %17 {strides = array<i32>} : memref<8x8x128xf32, #tpu.memory_space<vmem>>, vector<1x8x128xf32>,
    %18 = vector.extract_strided_slice %7 {offsets = [1, 0, 0], sizes = [1, 8, 128], strides = [1, 1, 1]} : vector<8x8x128xf32> to vector<1x8x128xf32>
    %19 = vector.shape_cast %18 : vector<1x8x128xf32> to vector<8x128xf32>
    %cst_14 = arith.constant dense<0.000000e+00> : vector<8x128xf32>
    %20 = tpu.matmul %14, %8, %cst_14 {dimension_numbers = #tpu.dot_dimension_numbers<[1], [0], [0], [1], [0, 0, 1, 1], [], []>} : vector<8x128xf32>, vector<128x128xf32>, vector<8x128xf32> -> vector<8x128xf32>
    %21 = arith.addf %19, %20 : vector<8x128xf32>
    %22 = math.tanh %21 : vector<8x128xf32>
    %c1 = arith.constant 1 : index
    %c0_15 = arith.constant 0 : index
    %c0_16 = arith.constant 0 : index
    %23 = vector.load %arg9[%c1, %c0_15, %c0_16] : memref<8x8x128xf32, #tpu.memory_space<vmem>>, vector<1x8x128xf32>
    %24 = vector.shape_cast %23 : vector<1x8x128xf32> to vector<8x128xf32>
    %25 = vector.shape_cast %22 : vector<8x128xf32> to vector<1x8x128xf32>
    tpu.vector_store %arg9[%c1, %c0_15, %c0_16], %25 {strides = array<i32>} : memref<8x8x128xf32, #tpu.memory_space<vmem>>, vector<1x8x128xf32>,
    %26 = vector.extract_strided_slice %7 {offsets = [2, 0, 0], sizes = [1, 8, 128], strides = [1, 1, 1]} : vector<8x8x128xf32> to vector<1x8x128xf32>
    %27 = vector.shape_cast %26 : vector<1x8x128xf32> to vector<8x128xf32>
    %cst_17 = arith.constant dense<0.000000e+00> : vector<8x128xf32>
    %28 = tpu.matmul %22, %8, %cst_17 {dimension_numbers = #tpu.dot_dimension_numbers<[1], [0], [0], [1], [0, 0, 1, 1], [], []>} : vector<8x128xf32>, vector<128x128xf32>, vector<8x128xf32> -> vector<8x128xf32>
    %29 = arith.addf %27, %28 : vector<8x128xf32>
    %30 = math.tanh %29 : vector<8x128xf32>
    %c2 = arith.constant 2 : index
    %c0_18 = arith.constant 0 : index
    %c0_19 = arith.constant 0 : index
    %31 = vector.load %arg9[%c2, %c0_18, %c0_19] : memref<8x8x128xf32, #tpu.memory_space<vmem>>, vector<1x8x128xf32>
    %32 = vector.shape_cast %31 : vector<1x8x128xf32> to vector<8x128xf32>
    %33 = vector.shape_cast %30 : vector<8x128xf32> to vector<1x8x128xf32>
    tpu.vector_store %arg9[%c2, %c0_18, %c0_19], %33 {strides = array<i32>} : memref<8x8x128xf32, #tpu.memory_space<vmem>>, vector<1x8x128xf32>,
    %34 = vector.extract_strided_slice %7 {offsets = [3, 0, 0], sizes = [1, 8, 128], strides = [1, 1, 1]} : vector<8x8x128xf32> to vector<1x8x128xf32>
    %35 = vector.shape_cast %34 : vector<1x8x128xf32> to vector<8x128xf32>
    %cst_20 = arith.constant dense<0.000000e+00> : vector<8x128xf32>
    %36 = tpu.matmul %30, %8, %cst_20 {dimension_numbers = #tpu.dot_dimension_numbers<[1], [0], [0], [1], [0, 0, 1, 1], [], []>} : vector<8x128xf32>, vector<128x128xf32>, vector<8x128xf32> -> vector<8x128xf32>
    %37 = arith.addf %35, %36 : vector<8x128xf32>
    %38 = math.tanh %37 : vector<8x128xf32>
    %c3 = arith.constant 3 : index
    %c0_21 = arith.constant 0 : index
    %c0_22 = arith.constant 0 : index
    %39 = vector.load %arg9[%c3, %c0_21, %c0_22] : memref<8x8x128xf32, #tpu.memory_space<vmem>>, vector<1x8x128xf32>
    %40 = vector.shape_cast %39 : vector<1x8x128xf32> to vector<8x128xf32>
    %41 = vector.shape_cast %38 : vector<8x128xf32> to vector<1x8x128xf32>
    tpu.vector_store %arg9[%c3, %c0_21, %c0_22], %41 {strides = array<i32>} : memref<8x8x128xf32, #tpu.memory_space<vmem>>, vector<1x8x128xf32>,
    %42 = vector.extract_strided_slice %7 {offsets = [4, 0, 0], sizes = [1, 8, 128], strides = [1, 1, 1]} : vector<8x8x128xf32> to vector<1x8x128xf32>
    %43 = vector.shape_cast %42 : vector<1x8x128xf32> to vector<8x128xf32>
    %cst_23 = arith.constant dense<0.000000e+00> : vector<8x128xf32>
    %44 = tpu.matmul %38, %8, %cst_23 {dimension_numbers = #tpu.dot_dimension_numbers<[1], [0], [0], [1], [0, 0, 1, 1], [], []>} : vector<8x128xf32>, vector<128x128xf32>, vector<8x128xf32> -> vector<8x128xf32>
    %45 = arith.addf %43, %44 : vector<8x128xf32>
    %46 = math.tanh %45 : vector<8x128xf32>
    %c4 = arith.constant 4 : index
    %c0_24 = arith.constant 0 : index
    %c0_25 = arith.constant 0 : index
    %47 = vector.load %arg9[%c4, %c0_24, %c0_25] : memref<8x8x128xf32, #tpu.memory_space<vmem>>, vector<1x8x128xf32>
    %48 = vector.shape_cast %47 : vector<1x8x128xf32> to vector<8x128xf32>
    %49 = vector.shape_cast %46 : vector<8x128xf32> to vector<1x8x128xf32>
    tpu.vector_store %arg9[%c4, %c0_24, %c0_25], %49 {strides = array<i32>} : memref<8x8x128xf32, #tpu.memory_space<vmem>>, vector<1x8x128xf32>,
    %50 = vector.extract_strided_slice %7 {offsets = [5, 0, 0], sizes = [1, 8, 128], strides = [1, 1, 1]} : vector<8x8x128xf32> to vector<1x8x128xf32>
    %51 = vector.shape_cast %50 : vector<1x8x128xf32> to vector<8x128xf32>
    %cst_26 = arith.constant dense<0.000000e+00> : vector<8x128xf32>
    %52 = tpu.matmul %46, %8, %cst_26 {dimension_numbers = #tpu.dot_dimension_numbers<[1], [0], [0], [1], [0, 0, 1, 1], [], []>} : vector<8x128xf32>, vector<128x128xf32>, vector<8x128xf32> -> vector<8x128xf32>
    %53 = arith.addf %51, %52 : vector<8x128xf32>
    %54 = math.tanh %53 : vector<8x128xf32>
    %c5 = arith.constant 5 : index
    %c0_27 = arith.constant 0 : index
    %c0_28 = arith.constant 0 : index
    %55 = vector.load %arg9[%c5, %c0_27, %c0_28] : memref<8x8x128xf32, #tpu.memory_space<vmem>>, vector<1x8x128xf32>
    %56 = vector.shape_cast %55 : vector<1x8x128xf32> to vector<8x128xf32>
    %57 = vector.shape_cast %54 : vector<8x128xf32> to vector<1x8x128xf32>
    tpu.vector_store %arg9[%c5, %c0_27, %c0_28], %57 {strides = array<i32>} : memref<8x8x128xf32, #tpu.memory_space<vmem>>, vector<1x8x128xf32>,
    %58 = vector.extract_strided_slice %7 {offsets = [6, 0, 0], sizes = [1, 8, 128], strides = [1, 1, 1]} : vector<8x8x128xf32> to vector<1x8x128xf32>
    %59 = vector.shape_cast %58 : vector<1x8x128xf32> to vector<8x128xf32>
    %cst_29 = arith.constant dense<0.000000e+00> : vector<8x128xf32>
    %60 = tpu.matmul %54, %8, %cst_29 {dimension_numbers = #tpu.dot_dimension_numbers<[1], [0], [0], [1], [0, 0, 1, 1], [], []>} : vector<8x128xf32>, vector<128x128xf32>, vector<8x128xf32> -> vector<8x128xf32>
    %61 = arith.addf %59, %60 : vector<8x128xf32>
    %62 = math.tanh %61 : vector<8x128xf32>
    %c6 = arith.constant 6 : index
    %c0_30 = arith.constant 0 : index
    %c0_31 = arith.constant 0 : index
    %63 = vector.load %arg9[%c6, %c0_30, %c0_31] : memref<8x8x128xf32, #tpu.memory_space<vmem>>, vector<1x8x128xf32>
    %64 = vector.shape_cast %63 : vector<1x8x128xf32> to vector<8x128xf32>
    %65 = vector.shape_cast %62 : vector<8x128xf32> to vector<1x8x128xf32>
    tpu.vector_store %arg9[%c6, %c0_30, %c0_31], %65 {strides = array<i32>} : memref<8x8x128xf32, #tpu.memory_space<vmem>>, vector<1x8x128xf32>,
    %66 = vector.extract_strided_slice %7 {offsets = [7, 0, 0], sizes = [1, 8, 128], strides = [1, 1, 1]} : vector<8x8x128xf32> to vector<1x8x128xf32>
    %67 = vector.shape_cast %66 : vector<1x8x128xf32> to vector<8x128xf32>
    %cst_32 = arith.constant dense<0.000000e+00> : vector<8x128xf32>
    %68 = tpu.matmul %62, %8, %cst_32 {dimension_numbers = #tpu.dot_dimension_numbers<[1], [0], [0], [1], [0, 0, 1, 1], [], []>} : vector<8x128xf32>, vector<128x128xf32>, vector<8x128xf32> -> vector<8x128xf32>
    %69 = arith.addf %67, %68 : vector<8x128xf32>
    %70 = math.tanh %69 : vector<8x128xf32>
    %c7 = arith.constant 7 : index
    %c0_33 = arith.constant 0 : index
    %c0_34 = arith.constant 0 : index
    %71 = vector.load %arg9[%c7, %c0_33, %c0_34] : memref<8x8x128xf32, #tpu.memory_space<vmem>>, vector<1x8x128xf32>
    %72 = vector.shape_cast %71 : vector<1x8x128xf32> to vector<8x128xf32>
    %73 = vector.shape_cast %70 : vector<8x128xf32> to vector<1x8x128xf32>
    tpu.vector_store %arg9[%c7, %c0_33, %c0_34], %73 {strides = array<i32>} : memref<8x8x128xf32, #tpu.memory_space<vmem>>, vector<1x8x128xf32>,
    %c0_35 = arith.constant 0 : index
    %c0_36 = arith.constant 0 : index
    %74 = vector.load %arg8[%c0_35, %c0_36] : memref<8x128xf32, #tpu.memory_space<vmem>>, vector<8x128xf32>
    tpu.vector_store %arg8[%c0_35, %c0_36], %70 {strides = array<i32>} : memref<8x128xf32, #tpu.memory_space<vmem>>, vector<8x128xf32>,
    %c0_37 = arith.constant 0 : index
    %c0_38 = arith.constant 0 : index
    %c0_39 = arith.constant 0 : index
    %75 = vector.load %arg9[%c0_37, %c0_38, %c0_39] : memref<8x8x128xf32, #tpu.memory_space<vmem>>, vector<8x8x128xf32>
    %76 = vector.shape_cast %75 : vector<8x8x128xf32> to vector<64x128xf32>
    %c0_40 = arith.constant 0 : index
    %c0_41 = arith.constant 0 : index
    %77 = vector.load %arg5[%c0_40, %c0_41] : memref<128x128xf32, #tpu.memory_space<vmem>>, vector<128x128xf32>
    %cst_42 = arith.constant dense<0.000000e+00> : vector<64x128xf32>
    %78 = tpu.matmul %76, %77, %cst_42 {dimension_numbers = #tpu.dot_dimension_numbers<[1], [0], [0], [1], [0, 0, 1, 1], [], []>} : vector<64x128xf32>, vector<128x128xf32>, vector<64x128xf32> -> vector<64x128xf32>
    %c0_43 = arith.constant 0 : index
    %c0_44 = arith.constant 0 : index
    %79 = vector.load %arg6[%c0_43, %c0_44] : memref<1x128xf32, #tpu.memory_space<vmem>>, vector<1x128xf32>
    %80 = vector.broadcast %79 : vector<1x128xf32> to vector<64x128xf32>
    %81 = arith.addf %78, %80 : vector<64x128xf32>
    %c0_45 = arith.constant 0 : index
    %c0_46 = arith.constant 0 : index
    %82 = vector.load %arg7[%c0_45, %c0_46] : memref<64x128xf32, #tpu.memory_space<vmem>>, vector<64x128xf32>
    tpu.vector_store %arg7[%c0_45, %c0_46], %81 {strides = array<i32>} : memref<64x128xf32, #tpu.memory_space<vmem>>, vector<64x128xf32>,
    return
  }
}

</mosaic_0001>

<llo_original>
// kernel: tpu_custom_call.1
$region0: #{tpu_custom_call.1}
  #allocation0 [shape = 'u32[]', space=smem, size = 0x4, offset = 0x4, fixed_abs, tag = 'smem constant byte address 0x4 - core index']
  #allocation1 [shape = 'u32[144,128]{1,0:T(1,128)}', space=vmem, size = 0x12000, scoped, tag = 'internal scratch']
  #allocation2 [shape = 'f32[8,8,128]{2,1,0:T(8,128)}', space=vmem, size = 0x8000, scoped, tag = 'scratch operand']
  %s0 = inlined_call_operand.hbm [shape: f32[8,8,128], index: 0, kind: input, shape index: {}]
  %s1 = inlined_call_operand.hbm [shape: f32[8,128], index: 1, kind: input, shape index: {}]
  %s2 = inlined_call_operand.hbm [shape: f32[128,128], index: 2, kind: input, shape index: {}]
  %s3 = inlined_call_operand.hbm [shape: f32[128,128], index: 3, kind: input, shape index: {}]
  %s4 = inlined_call_operand.vmem [shape: f32[1,128], index: 4, kind: input, shape index: {}]
  %s5 = inlined_call_operand.hbm [shape: f32[128,128], index: 5, kind: input, shape index: {}]
  %s6 = inlined_call_operand.vmem [shape: f32[1,128], index: 6, kind: input, shape index: {}]
  %s7 = inlined_call_operand.hbm [shape: f32[64,128], index: 7, kind: output, shape index: {0}]
  %s8 = inlined_call_operand.hbm [shape: f32[8,128], index: 8, kind: output, shape index: {1}]
  %9 = xla_tuple %s7, %s8
  %s10 = sld [smem:[#allocation0]]
  $region66: #{tpu_custom_call.1} parent=0
    _
  %s12 = ssub.s32 1, %s10
  %s13 = scalar_select 0, %s12, %s10
  $region1: #{tpu_custom_call.1} parent=0
    #allocation3 [shape = 'u8[32768]{0}', space=vmem, size = 0x8000, scoped, tag = 'input window, operand 0, single buffered']
    #allocation4 [shape = 's32[1]{0}', space=sflag, size = 0x4, scoped, tag = 'scoped memory for tpu_custom_call.1']
    #allocation5 [shape = 's32[1]{0}', space=sflag, size = 0x4, scoped, tag = 'scoped memory for tpu_custom_call.1']
    #allocation6 [shape = 'u8[4096]{0}', space=vmem, size = 0x1000, scoped, tag = 'input window, operand 1, single buffered']
    #allocation7 [shape = 's32[1]{0}', space=sflag, size = 0x4, scoped, tag = 'scoped memory for tpu_custom_call.1']
    #allocation8 [shape = 'u8[65536]{0}', space=vmem, size = 0x10000, scoped, tag = 'input window, operand 2, single buffered']
    #allocation9 [shape = 'u8[65536]{0}', space=vmem, size = 0x10000, scoped, tag = 'input window, operand 3, single buffered']
    #allocation10 [shape = 's32[1]{0}', space=sflag, size = 0x4, scoped, tag = 'scoped memory for tpu_custom_call.1']
    #allocation11 [shape = 'u8[65536]{0}', space=vmem, size = 0x10000, scoped, tag = 'input window, operand 5, single buffered']
    #allocation12 [shape = 'u8[32768]{0}', space=vmem, size = 0x8000, scoped, tag = 'output window, operand 0, single buffered']
    #allocation13 [shape = 'u8[4096]{0}', space=vmem, size = 0x1000, scoped, tag = 'output window, operand 1, single buffered']
    #allocation14 [shape = 's32[1]{0}', space=sflag, size = 0x4, scoped, tag = 'scoped memory for tpu_custom_call.1']
    %14 = vsyncpa [#allocation4], 0
    %15 = vsyncpa [#allocation7], 0
    %16 = vsyncpa [#allocation10], 0
    %17 = vsyncpa [#allocation5], 0
    %18 = vsyncpa [#allocation14], 0
    // Predicated region
    $region2: #{tpu_custom_call.1} parent=1 // pred_check
      _
    $region3: #{tpu_custom_call.1} parent=1 // pred_check_branch
      %20 = sbr.rel (0) target = $region5
    $region4: #{tpu_custom_call.1} parent=1 // pred_region
      %s22 = ssub.s32 1024, 1024
      %23 = vsyncadd [#allocation4], %s22
      %s24 = sshll.u32 [#allocation3], 4
      %s25 = int_to_ptr.vmem [resolvable:$true] %s24
      %30 = dma.hbm_to_vmem [thread:$0]  %s0, 1024, %s25, [#allocation4], 128, 128, 8
    $region5: #{tpu_custom_call.1} parent=1 // pred_fallthru
      _
    // Predicated region
    $region6: #{tpu_custom_call.1} parent=1 // pred_check
      _
    $region7: #{tpu_custom_call.1} parent=1 // pred_check_branch
      %32 = sbr.rel (0) target = $region9
    $region8: #{tpu_custom_call.1} parent=1 // pred_region
      %s34 = ssub.s32 128, 128
      %35 = vsyncadd [#allocation7], %s34
      %s37 = sshll.u32 [#allocation6], 4
      %s38 = int_to_ptr.vmem [resolvable:$true] %s37
      %40 = dma.hbm_to_vmem [thread:$0]  %s1, 128, %s38, [#allocation7]
    $region9: #{tpu_custom_call.1} parent=1 // pred_fallthru
      _
    // Predicated region
    $region10: #{tpu_custom_call.1} parent=1 // pred_check
      _
    $region11: #{tpu_custom_call.1} parent=1 // pred_check_branch
      %42 = sbr.rel (0) target = $region13
    $region12: #{tpu_custom_call.1} parent=1 // pred_region
      %s44 = ssub.s32 2048, 2048
      %45 = vsyncadd [#allocation7], %s44
      %s46 = sshll.u32 [#allocation8], 4
      %s47 = int_to_ptr.vmem [resolvable:$true] %s46
      %52 = dma.hbm_to_vmem [thread:$0]  %s2, 2048, %s47, [#allocation7], 128, 128, 8
    $region13: #{tpu_custom_call.1} parent=1 // pred_fallthru
      _
    // Predicated region
    $region14: #{tpu_custom_call.1} parent=1 // pred_check
      _
    $region15: #{tpu_custom_call.1} parent=1 // pred_check_branch
      %54 = sbr.rel (0) target = $region17
    $region16: #{tpu_custom_call.1} parent=1 // pred_region
      %s56 = ssub.s32 2048, 2048
      %57 = vsyncadd [#allocation10], %s56
      %s58 = sshll.u32 [#allocation9], 4
      %s59 = int_to_ptr.vmem [resolvable:$true] %s58
      %64 = dma.hbm_to_vmem [thread:$0]  %s3, 2048, %s59, [#allocation10], 128, 128, 8
    $region17: #{tpu_custom_call.1} parent=1 // pred_fallthru
      _
    // Predicated region
    $region18: #{tpu_custom_call.1} parent=1 // pred_check
      _
    $region19: #{tpu_custom_call.1} parent=1 // pred_check_branch
      %66 = sbr.rel (0) target = $region21
    $region20: #{tpu_custom_call.1} parent=1 // pred_region
      _
    $region21: #{tpu_custom_call.1} parent=1 // pred_fallthru
      _
    // Predicated region
    $region22: #{tpu_custom_call.1} parent=1 // pred_check
      _
    $region23: #{tpu_custom_call.1} parent=1 // pred_check_branch
      %68 = sbr.rel (0) target = $region25
    $region24: #{tpu_custom_call.1} parent=1 // pred_region
      %s70 = ssub.s32 2048, 2048
      %71 = vsyncadd [#allocation10], %s70
      %s72 = sshll.u32 [#allocation11], 4
      %s73 = int_to_ptr.vmem [resolvable:$true] %s72
      %78 = dma.hbm_to_vmem [thread:$0]  %s5, 2048, %s73, [#allocation10], 128, 128, 8
    $region25: #{tpu_custom_call.1} parent=1 // pred_fallthru
      _
    // Predicated region
    $region26: #{tpu_custom_call.1} parent=1 // pred_check
      _
    $region27: #{tpu_custom_call.1} parent=1 // pred_check_branch
      %80 = sbr.rel (0) target = $region29
    $region28: #{tpu_custom_call.1} parent=1 // pred_region
      _
    $region29: #{tpu_custom_call.1} parent=1 // pred_fallthru
      _
    // Predicated region
    $region30: #{tpu_custom_call.1} parent=1 // pred_check
      _
    $region31: #{tpu_custom_call.1} parent=1 // pred_check_branch
      %82 = sbr.rel (0) target = $region33
    $region32: #{tpu_custom_call.1} parent=1 // pred_region
      %83 = dma.done [#allocation4], 1024
    $region33: #{tpu_custom_call.1} parent=1 // pred_fallthru
      _
    // Predicated region
    $region34: #{tpu_custom_call.1} parent=1 // pred_check
      _
    $region35: #{tpu_custom_call.1} parent=1 // pred_check_branch
      %85 = sbr.rel (0) target = $region37
    $region36: #{tpu_custom_call.1} parent=1 // pred_region
      %86 = dma.done [#allocation7], 128
    $region37: #{tpu_custom_call.1} parent=1 // pred_fallthru
      _
    // Predicated region
    $region38: #{tpu_custom_call.1} parent=1 // pred_check
      _
    $region39: #{tpu_custom_call.1} parent=1 // pred_check_branch
      %88 = sbr.rel (0) target = $region41
    $region40: #{tpu_custom_call.1} parent=1 // pred_region
      %89 = dma.done [#allocation7], 2048
    $region41: #{tpu_custom_call.1} parent=1 // pred_fallthru
      _
    // Predicated region
    $region42: #{tpu_custom_call.1} parent=1 // pred_check
      _
    $region43: #{tpu_custom_call.1} parent=1 // pred_check_branch
      %91 = sbr.rel (0) target = $region45
    $region44: #{tpu_custom_call.1} parent=1 // pred_region
      %92 = dma.done [#allocation10], 2048
    $region45: #{tpu_custom_call.1} parent=1 // pred_fallthru
      _
    // Predicated region
    $region46: #{tpu_custom_call.1} parent=1 // pred_check
      _
    $region47: #{tpu_custom_call.1} parent=1 // pred_check_branch
      %94 = sbr.rel (0) target = $region49
    $region48: #{tpu_custom_call.1} parent=1 // pred_region
      %95 = dma.done [#allocation10], 2048
    $region49: #{tpu_custom_call.1} parent=1 // pred_fallthru
      _
    %v96 = vld [vmem:[#allocation3] sm:$0xff]
    %v97 = vld [vmem:[#allocation3 + $0x8] sm:$0xff]
    %v98 = vld [vmem:[#allocation3 + $0x10] sm:$0xff]
    %v99 = vld [vmem:[#allocation3 + $0x18] sm:$0xff]
    %v100 = vld [vmem:[#allocation3 + $0x20] sm:$0xff]
    %v101 = vld [vmem:[#allocation3 + $0x28] sm:$0xff]
    %v102 = vld [vmem:[#allocation3 + $0x30] sm:$0xff]
    %v103 = vld [vmem:[#allocation3 + $0x38] sm:$0xff]
    %v104 = vld [vmem:[#allocation8] sm:$0xff]
    %v105 = vld [vmem:[#allocation8 + $0x8] sm:$0xff]
    %v106 = vld [vmem:[#allocation8 + $0x10] sm:$0xff]
    %v107 = vld [vmem:[#allocation8 + $0x18] sm:$0xff]
    %v108 = vld [vmem:[#allocation8 + $0x20] sm:$0xff]
    %v109 = vld [vmem:[#allocation8 + $0x28] sm:$0xff]
    %v110 = vld [vmem:[#allocation8 + $0x30] sm:$0xff]
    %v111 = vld [vmem:[#allocation8 + $0x38] sm:$0xff]
    %v112 = vld [vmem:[#allocation8 + $0x40] sm:$0xff]
    %v113 = vld [vmem:[#allocation8 + $0x48] sm:$0xff]
    %v114 = vld [vmem:[#allocation8 + $0x50] sm:$0xff]
    %v115 = vld [vmem:[#allocation8 + $0x58] sm:$0xff]
    %v116 = vld [vmem:[#allocation8 + $0x60] sm:$0xff]
    %v117 = vld [vmem:[#allocation8 + $0x68] sm:$0xff]
    %v118 = vld [vmem:[#allocation8 + $0x70] sm:$0xff]
    %v119 = vld [vmem:[#allocation8 + $0x78] sm:$0xff]
    %v120 = vld [vmem:[%s4] sm:$0x1]
    %v122 = vlaneseq
    %v123 = vshrl.u32 %v122, 7
    %v124 = vsub.s32 0, %v123
    %v125 = vrot.slane %v120, %v124
    %127 = vmatprep.subr.mxu0 0.0
    %128 = vmatpush1.msra.mxu0 %v104
    %129 = vmatprep.subr.mxu0 0.0
    %130 = vmatpush1.msra.mxu0 %v105
    %131 = vmatprep.subr.mxu0 0.0
    %132 = vmatpush1.msra.mxu0 %v106
    %133 = vmatprep.subr.mxu0 0.0
    %134 = vmatpush1.msra.mxu0 %v107
    %135 = vmatprep.subr.mxu0 0.0
    %136 = vmatpush1.msra.mxu0 %v108
    %137 = vmatprep.subr.mxu0 0.0
    %138 = vmatpush1.msra.mxu0 %v109
    %139 = vmatprep.subr.mxu0 0.0
    %140 = vmatpush1.msra.mxu0 %v110
    %141 = vmatprep.subr.mxu0 0.0
    %142 = vmatpush1.msra.mxu0 %v111
    %143 = vmatprep.subr.mxu0 0.0
    %144 = vmatpush1.msra.mxu0 %v112
    %145 = vmatprep.subr.mxu0 0.0
    %146 = vmatpush1.msra.mxu0 %v113
    %147 = vmatprep.subr.mxu0 0.0
    %148 = vmatpush1.msra.mxu0 %v114
    %149 = vmatprep.subr.mxu0 0.0
    %150 = vmatpush1.msra.mxu0 %v115
    %151 = vmatprep.subr.mxu0 0.0
    %152 = vmatpush1.msra.mxu0 %v116
    %153 = vmatprep.subr.mxu0 0.0
    %154 = vmatpush1.msra.mxu0 %v117
    %155 = vmatprep.subr.mxu0 0.0
    %156 = vmatpush1.msra.mxu0 %v118
    %157 = vmatprep.subr.mxu0 0.0
    %158 = vmatpush1.msra.mxu0 %v119
    %159 = vmatprep.subr.mxu0 0.0
    %160 = vmatpush1.msra.mxu0 0.0
    %161 = vmatprep.subr.mxu0 0.0
    %162 = vmatpush1.msra.mxu0 0.0
    %163 = vmatprep.subr.mxu0 0.0
    %164 = vmatpush1.msra.mxu0 0.0
    %165 = vmatprep.subr.mxu0 0.0
    %166 = vmatpush1.msra.mxu0 0.0
    %167 = vmatprep.subr.mxu0 0.0
    %168 = vmatpush1.msra.mxu0 0.0
    %169 = vmatprep.subr.mxu0 0.0
    %170 = vmatpush1.msra.mxu0 0.0
    %171 = vmatprep.subr.mxu0 0.0
    %172 = vmatpush1.msra.mxu0 0.0
    %173 = vmatprep.subr.mxu0 0.0
    %174 = vmatpush1.msra.mxu0 0.0
    %175 = vmatprep.subr.mxu0 0.0
    %176 = vmatpush1.msra.mxu0 0.0
    %177 = vmatprep.subr.mxu0 0.0
    %178 = vmatpush1.msra.mxu0 0.0
    %179 = vmatprep.subr.mxu0 0.0
    %180 = vmatpush1.msra.mxu0 0.0
    %181 = vmatprep.subr.mxu0 0.0
    %182 = vmatpush1.msra.mxu0 0.0
    %183 = vmatprep.subr.mxu0 0.0
    %184 = vmatpush1.msra.mxu0 0.0
    %185 = vmatprep.subr.mxu0 0.0
    %186 = vmatpush1.msra.mxu0 0.0
    %187 = vmatprep.subr.mxu0 0.0
    %188 = vmatpush1.msra.mxu0 0.0
    %189 = vmatprep.subr.mxu0 0.0
    %190 = vmatpush1.msra.mxu0 0.0
    %191 = vmatprep.mubr.f32.mxu0 0.0
    %192 = vmatmul.mubr.f32.gmra.mrb[0].mxu0 %v96
    %v193 = vpop.f32.mrb[0].mxu0
    %v194 = vadd.f32 %v125, %v193
    %v195 = vpop.f32.mrb[0].mxu0
    %196 = vmatprep.mubr.f32.mxu0 0.0
    %197 = vmatmul.mubr.f32.gmra.mrb[0].mxu0 %v97
    %v198 = vpop.f32.mrb[0].mxu0
    %v199 = vadd.f32 %v125, %v198
    %v200 = vpop.f32.mrb[0].mxu0
    %201 = vmatprep.mubr.f32.mxu0 0.0
    %202 = vmatmul.mubr.f32.gmra.mrb[0].mxu0 %v98
    %v203 = vpop.f32.mrb[0].mxu0
    %v204 = vadd.f32 %v125, %v203
    %v205 = vpop.f32.mrb[0].mxu0
    %206 = vmatprep.mubr.f32.mxu0 0.0
    %207 = vmatmul.mubr.f32.gmra.mrb[0].mxu0 %v99
    %v208 = vpop.f32.mrb[0].mxu0
    %v209 = vadd.f32 %v125, %v208
    %v210 = vpop.f32.mrb[0].mxu0
    %211 = vmatprep.mubr.f32.mxu0 0.0
    %212 = vmatmul.mubr.f32.gmra.mrb[0].mxu0 %v100
    %v213 = vpop.f32.mrb[0].mxu0
    %v214 = vadd.f32 %v125, %v213
    %v215 = vpop.f32.mrb[0].mxu0
    %216 = vmatprep.mubr.f32.mxu0 0.0
    %217 = vmatmul.mubr.f32.gmra.mrb[0].mxu0 %v101
    %v218 = vpop.f32.mrb[0].mxu0
    %v219 = vadd.f32 %v125, %v218
    %v220 = vpop.f32.mrb[0].mxu0
    %221 = vmatprep.mubr.f32.mxu0 0.0
    %222 = vmatmul.mubr.f32.gmra.mrb[0].mxu0 %v102
    %v223 = vpop.f32.mrb[0].mxu0
    %v224 = vadd.f32 %v125, %v223
    %v225 = vpop.f32.mrb[0].mxu0
    %226 = vmatprep.mubr.f32.mxu0 0.0
    %227 = vmatmul.mubr.f32.gmra.mrb[0].mxu0 %v103
    %v228 = vpop.f32.mrb[0].mxu0
    %v229 = vadd.f32 %v125, %v228
    %v230 = vpop.f32.mrb[0].mxu0
    %231 = vdwg.mxu0
    %v232 = vld [vmem:[#allocation9] sm:$0xff]
    %v233 = vld [vmem:[#allocation9 + $0x8] sm:$0xff]
    %v234 = vld [vmem:[#allocation9 + $0x10] sm:$0xff]
    %v235 = vld [vmem:[#allocation9 + $0x18] sm:$0xff]
    %v236 = vld [vmem:[#allocation9 + $0x20] sm:$0xff]
    %v237 = vld [vmem:[#allocation9 + $0x28] sm:$0xff]
    %v238 = vld [vmem:[#allocation9 + $0x30] sm:$0xff]
    %v239 = vld [vmem:[#allocation9 + $0x38] sm:$0xff]
    %v240 = vld [vmem:[#allocation9 + $0x40] sm:$0xff]
    %v241 = vld [vmem:[#allocation9 + $0x48] sm:$0xff]
    %v242 = vld [vmem:[#allocation9 + $0x50] sm:$0xff]
    %v243 = vld [vmem:[#allocation9 + $0x58] sm:$0xff]
    %v244 = vld [vmem:[#allocation9 + $0x60] sm:$0xff]
    %v245 = vld [vmem:[#allocation9 + $0x68] sm:$0xff]
    %v246 = vld [vmem:[#allocation9 + $0x70] sm:$0xff]
    %v247 = vld [vmem:[#allocation9 + $0x78] sm:$0xff]
    %v248 = vld [vmem:[#allocation6] sm:$0xff]
    %249 = vmatprep.subr.mxu0 0.0
    %250 = vmatpush1.msra.mxu0 %v232
    %251 = vmatprep.subr.mxu0 0.0
    %252 = vmatpush1.msra.mxu0 %v233
    %253 = vmatprep.subr.mxu0 0.0
    %254 = vmatpush1.msra.mxu0 %v234
    %255 = vmatprep.subr.mxu0 0.0
    %256 = vmatpush1.msra.mxu0 %v235
    %257 = vmatprep.subr.mxu0 0.0
    %258 = vmatpush1.msra.mxu0 %v236
    %259 = vmatprep.subr.mxu0 0.0
    %260 = vmatpush1.msra.mxu0 %v237
    %261 = vmatprep.subr.mxu0 0.0
    %262 = vmatpush1.msra.mxu0 %v238
    %263 = vmatprep.subr.mxu0 0.0
    %264 = vmatpush1.msra.mxu0 %v239
    %265 = vmatprep.subr.mxu0 0.0
    %266 = vmatpush1.msra.mxu0 %v240
    %267 = vmatprep.subr.mxu0 0.0
    %268 = vmatpush1.msra.mxu0 %v241
    %269 = vmatprep.subr.mxu0 0.0
    %270 = vmatpush1.msra.mxu0 %v242
    %271 = vmatprep.subr.mxu0 0.0
    %272 = vmatpush1.msra.mxu0 %v243
    %273 = vmatprep.subr.mxu0 0.0
    %274 = vmatpush1.msra.mxu0 %v244
    %275 = vmatprep.subr.mxu0 0.0
    %276 = vmatpush1.msra.mxu0 %v245
    %277 = vmatprep.subr.mxu0 0.0
    %278 = vmatpush1.msra.mxu0 %v246
    %279 = vmatprep.subr.mxu0 0.0
    %280 = vmatpush1.msra.mxu0 %v247
    %281 = vmatprep.subr.mxu0 0.0
    %282 = vmatpush1.msra.mxu0 0.0
    %283 = vmatprep.subr.mxu0 0.0
    %284 = vmatpush1.msra.mxu0 0.0
    %285 = vmatprep.subr.mxu0 0.0
    %286 = vmatpush1.msra.mxu0 0.0
    %287 = vmatprep.subr.mxu0 0.0
    %288 = vmatpush1.msra.mxu0 0.0
    %289 = vmatprep.subr.mxu0 0.0
    %290 = vmatpush1.msra.mxu0 0.0
    %291 = vmatprep.subr.mxu0 0.0
    %292 = vmatpush1.msra.mxu0 0.0
    %293 = vmatprep.subr.mxu0 0.0
    %294 = vmatpush1.msra.mxu0 0.0
    %295 = vmatprep.subr.mxu0 0.0
    %296 = vmatpush1.msra.mxu0 0.0
    %297 = vmatprep.subr.mxu0 0.0
    %298 = vmatpush1.msra.mxu0 0.0
    %299 = vmatprep.subr.mxu0 0.0
    %300 = vmatpush1.msra.mxu0 0.0
    %301 = vmatprep.subr.mxu0 0.0
    %302 = vmatpush1.msra.mxu0 0.0
    %303 = vmatprep.subr.mxu0 0.0
    %304 = vmatpush1.msra.mxu0 0.0
    %305 = vmatprep.subr.mxu0 0.0
    %306 = vmatpush1.msra.mxu0 0.0
    %307 = vmatprep.subr.mxu0 0.0
    %308 = vmatpush1.msra.mxu0 0.0
    %309 = vmatprep.subr.mxu0 0.0
    %310 = vmatpush1.msra.mxu0 0.0
    %311 = vmatprep.subr.mxu0 0.0
    %312 = vmatpush1.msra.mxu0 0.0
    %313 = vmatprep.mubr.f32.mxu0 0.0
    %314 = vmatmul.mubr.f32.gmra.mrb[0].mxu0 %v248
    %v315 = vpop.f32.mrb[0].mxu0
    %v316 = vadd.f32 0.0, %v315
    %v317 = vpop.f32.mrb[0].mxu0
    %318 = vdwg.mxu0
    %v319 = vadd.f32 %v194, %v316
    %v320 = vtanh.pop %v319
    %321 = vst [vmem:[#allocation2] sm:$0xff] %v320
    %322 = vmatprep.subr.mxu0 0.0
    %323 = vmatpush1.msra.mxu0 %v232
    %324 = vmatprep.subr.mxu0 0.0
    %325 = vmatpush1.msra.mxu0 %v233
    %326 = vmatprep.subr.mxu0 0.0
    %327 = vmatpush1.msra.mxu0 %v234
    %328 = vmatprep.subr.mxu0 0.0
    %329 = vmatpush1.msra.mxu0 %v235
    %330 = vmatprep.subr.mxu0 0.0
    %331 = vmatpush1.msra.mxu0 %v236
    %332 = vmatprep.subr.mxu0 0.0
    %333 = vmatpush1.msra.mxu0 %v237
    %334 = vmatprep.subr.mxu0 0.0
    %335 = vmatpush1.msra.mxu0 %v238
    %336 = vmatprep.subr.mxu0 0.0
    %337 = vmatpush1.msra.mxu0 %v239
    %338 = vmatprep.subr.mxu0 0.0
    %339 = vmatpush1.msra.mxu0 %v240
    %340 = vmatprep.subr.mxu0 0.0
    %341 = vmatpush1.msra.mxu0 %v241
    %342 = vmatprep.subr.mxu0 0.0
    %343 = vmatpush1.msra.mxu0 %v242
    %344 = vmatprep.subr.mxu0 0.0
    %345 = vmatpush1.msra.mxu0 %v243
    %346 = vmatprep.subr.mxu0 0.0
    %347 = vmatpush1.msra.mxu0 %v244
    %348 = vmatprep.subr.mxu0 0.0
    %349 = vmatpush1.msra.mxu0 %v245
    %350 = vmatprep.subr.mxu0 0.0
    %351 = vmatpush1.msra.mxu0 %v246
    %352 = vmatprep.subr.mxu0 0.0
    %353 = vmatpush1.msra.mxu0 %v247
    %354 = vmatprep.subr.mxu0 0.0
    %355 = vmatpush1.msra.mxu0 0.0
    %356 = vmatprep.subr.mxu0 0.0
    %357 = vmatpush1.msra.mxu0 0.0
    %358 = vmatprep.subr.mxu0 0.0
    %359 = vmatpush1.msra.mxu0 0.0
    %360 = vmatprep.subr.mxu0 0.0
    %361 = vmatpush1.msra.mxu0 0.0
    %362 = vmatprep.subr.mxu0 0.0
    %363 = vmatpush1.msra.mxu0 0.0
    %364 = vmatprep.subr.mxu0 0.0
    %365 = vmatpush1.msra.mxu0 0.0
    %366 = vmatprep.subr.mxu0 0.0
    %367 = vmatpush1.msra.mxu0 0.0
    %368 = vmatprep.subr.mxu0 0.0
    %369 = vmatpush1.msra.mxu0 0.0
    %370 = vmatprep.subr.mxu0 0.0
    %371 = vmatpush1.msra.mxu0 0.0
    %372 = vmatprep.subr.mxu0 0.0
    %373 = vmatpush1.msra.mxu0 0.0
    %374 = vmatprep.subr.mxu0 0.0
    %375 = vmatpush1.msra.mxu0 0.0
    %376 = vmatprep.subr.mxu0 0.0
    %377 = vmatpush1.msra.mxu0 0.0
    %378 = vmatprep.subr.mxu0 0.0
    %379 = vmatpush1.msra.mxu0 0.0
    %380 = vmatprep.subr.mxu0 0.0
    %381 = vmatpush1.msra.mxu0 0.0
    %382 = vmatprep.subr.mxu0 0.0
    %383 = vmatpush1.msra.mxu0 0.0
    %384 = vmatprep.subr.mxu0 0.0
    %385 = vmatpush1.msra.mxu0 0.0
    %386 = vmatprep.mubr.f32.mxu0 0.0
    %387 = vmatmul.mubr.f32.gmra.mrb[0].mxu0 %v320
    %v388 = vpop.f32.mrb[0].mxu0
    %v389 = vadd.f32 0.0, %v388
    %v390 = vpop.f32.mrb[0].mxu0
    %391 = vdwg.mxu0
    %v392 = vadd.f32 %v199, %v389
    %v393 = vtanh.pop %v392
    %s394 = scalar_lea.vmem [#allocation2], 8
    %395 = vst [vmem:[%s394] sm:$0xff] %v393
    %396 = vmatprep.subr.mxu0 0.0
    %397 = vmatpush1.msra.mxu0 %v232
    %398 = vmatprep.subr.mxu0 0.0
    %399 = vmatpush1.msra.mxu0 %v233
    %400 = vmatprep.subr.mxu0 0.0
    %401 = vmatpush1.msra.mxu0 %v234
    %402 = vmatprep.subr.mxu0 0.0
    %403 = vmatpush1.msra.mxu0 %v235
    %404 = vmatprep.subr.mxu0 0.0
    %405 = vmatpush1.msra.mxu0 %v236
    %406 = vmatprep.subr.mxu0 0.0
    %407 = vmatpush1.msra.mxu0 %v237
    %408 = vmatprep.subr.mxu0 0.0
    %409 = vmatpush1.msra.mxu0 %v238
    %410 = vmatprep.subr.mxu0 0.0
    %411 = vmatpush1.msra.mxu0 %v239
    %412 = vmatprep.subr.mxu0 0.0
    %413 = vmatpush1.msra.mxu0 %v240
    %414 = vmatprep.subr.mxu0 0.0
    %415 = vmatpush1.msra.mxu0 %v241
    %416 = vmatprep.subr.mxu0 0.0
    %417 = vmatpush1.msra.mxu0 %v242
    %418 = vmatprep.subr.mxu0 0.0
    %419 = vmatpush1.msra.mxu0 %v243
    %420 = vmatprep.subr.mxu0 0.0
    %421 = vmatpush1.msra.mxu0 %v244
    %422 = vmatprep.subr.mxu0 0.0
    %423 = vmatpush1.msra.mxu0 %v245
    %424 = vmatprep.subr.mxu0 0.0
    %425 = vmatpush1.msra.mxu0 %v246
    %426 = vmatprep.subr.mxu0 0.0
    %427 = vmatpush1.msra.mxu0 %v247
    %428 = vmatprep.subr.mxu0 0.0
    %429 = vmatpush1.msra.mxu0 0.0
    %430 = vmatprep.subr.mxu0 0.0
    %431 = vmatpush1.msra.mxu0 0.0
    %432 = vmatprep.subr.mxu0 0.0
    %433 = vmatpush1.msra.mxu0 0.0
    %434 = vmatprep.subr.mxu0 0.0
    %435 = vmatpush1.msra.mxu0 0.0
    %436 = vmatprep.subr.mxu0 0.0
    %437 = vmatpush1.msra.mxu0 0.0
    %438 = vmatprep.subr.mxu0 0.0
    %439 = vmatpush1.msra.mxu0 0.0
    %440 = vmatprep.subr.mxu0 0.0
    %441 = vmatpush1.msra.mxu0 0.0
    %442 = vmatprep.subr.mxu0 0.0
    %443 = vmatpush1.msra.mxu0 0.0
    %444 = vmatprep.subr.mxu0 0.0
    %445 = vmatpush1.msra.mxu0 0.0
    %446 = vmatprep.subr.mxu0 0.0
    %447 = vmatpush1.msra.mxu0 0.0
    %448 = vmatprep.subr.mxu0 0.0
    %449 = vmatpush1.msra.mxu0 0.0
    %450 = vmatprep.subr.mxu0 0.0
    %451 = vmatpush1.msra.mxu0 0.0
    %452 = vmatprep.subr.mxu0 0.0
    %453 = vmatpush1.msra.mxu0 0.0
    %454 = vmatprep.subr.mxu0 0.0
    %455 = vmatpush1.msra.mxu0 0.0
    %456 = vmatprep.subr.mxu0 0.0
    %457 = vmatpush1.msra.mxu0 0.0
    %458 = vmatprep.subr.mxu0 0.0
    %459 = vmatpush1.msra.mxu0 0.0
    %460 = vmatprep.mubr.f32.mxu0 0.0
    %461 = vmatmul.mubr.f32.gmra.mrb[0].mxu0 %v393
    %v462 = vpop.f32.mrb[0].mxu0
    %v463 = vadd.f32 0.0, %v462
    %v464 = vpop.f32.mrb[0].mxu0
    %465 = vdwg.mxu0
    %v466 = vadd.f32 %v204, %v463
    %v467 = vtanh.pop %v466
    %s468 = scalar_lea.vmem [#allocation2], 16
    %469 = vst [vmem:[%s468] sm:$0xff] %v467
    %470 = vmatprep.subr.mxu0 0.0
    %471 = vmatpush1.msra.mxu0 %v232
    %472 = vmatprep.subr.mxu0 0.0
    %473 = vmatpush1.msra.mxu0 %v233
    %474 = vmatprep.subr.mxu0 0.0
    %475 = vmatpush1.msra.mxu0 %v234
    %476 = vmatprep.subr.mxu0 0.0
    %477 = vmatpush1.msra.mxu0 %v235
    %478 = vmatprep.subr.mxu0 0.0
    %479 = vmatpush1.msra.mxu0 %v236
    %480 = vmatprep.subr.mxu0 0.0
    %481 = vmatpush1.msra.mxu0 %v237
    %482 = vmatprep.subr.mxu0 0.0
    %483 = vmatpush1.msra.mxu0 %v238
    %484 = vmatprep.subr.mxu0 0.0
    %485 = vmatpush1.msra.mxu0 %v239
    %486 = vmatprep.subr.mxu0 0.0
    %487 = vmatpush1.msra.mxu0 %v240
    %488 = vmatprep.subr.mxu0 0.0
    %489 = vmatpush1.msra.mxu0 %v241
    %490 = vmatprep.subr.mxu0 0.0
    %491 = vmatpush1.msra.mxu0 %v242
    %492 = vmatprep.subr.mxu0 0.0
    %493 = vmatpush1.msra.mxu0 %v243
    %494 = vmatprep.subr.mxu0 0.0
    %495 = vmatpush1.msra.mxu0 %v244
    %496 = vmatprep.subr.mxu0 0.0
    %497 = vmatpush1.msra.mxu0 %v245
    %498 = vmatprep.subr.mxu0 0.0
    %499 = vmatpush1.msra.mxu0 %v246
    %500 = vmatprep.subr.mxu0 0.0
    %501 = vmatpush1.msra.mxu0 %v247
    %502 = vmatprep.subr.mxu0 0.0
    %503 = vmatpush1.msra.mxu0 0.0
    %504 = vmatprep.subr.mxu0 0.0
    %505 = vmatpush1.msra.mxu0 0.0
    %506 = vmatprep.subr.mxu0 0.0
    %507 = vmatpush1.msra.mxu0 0.0
    %508 = vmatprep.subr.mxu0 0.0
    %509 = vmatpush1.msra.mxu0 0.0
    %510 = vmatprep.subr.mxu0 0.0
    %511 = vmatpush1.msra.mxu0 0.0
    %512 = vmatprep.subr.mxu0 0.0
    %513 = vmatpush1.msra.mxu0 0.0
    %514 = vmatprep.subr.mxu0 0.0
    %515 = vmatpush1.msra.mxu0 0.0
    %516 = vmatprep.subr.mxu0 0.0
    %517 = vmatpush1.msra.mxu0 0.0
    %518 = vmatprep.subr.mxu0 0.0
    %519 = vmatpush1.msra.mxu0 0.0
    %520 = vmatprep.subr.mxu0 0.0
    %521 = vmatpush1.msra.mxu0 0.0
    %522 = vmatprep.subr.mxu0 0.0
    %523 = vmatpush1.msra.mxu0 0.0
    %524 = vmatprep.subr.mxu0 0.0
    %525 = vmatpush1.msra.mxu0 0.0
    %526 = vmatprep.subr.mxu0 0.0
    %527 = vmatpush1.msra.mxu0 0.0
    %528 = vmatprep.subr.mxu0 0.0
    %529 = vmatpush1.msra.mxu0 0.0
    %530 = vmatprep.subr.mxu0 0.0
    %531 = vmatpush1.msra.mxu0 0.0
    %532 = vmatprep.subr.mxu0 0.0
    %533 = vmatpush1.msra.mxu0 0.0
    %534 = vmatprep.mubr.f32.mxu0 0.0
    %535 = vmatmul.mubr.f32.gmra.mrb[0].mxu0 %v467
    %v536 = vpop.f32.mrb[0].mxu0
    %v537 = vadd.f32 0.0, %v536
    %v538 = vpop.f32.mrb[0].mxu0
    %539 = vdwg.mxu0
    %v540 = vadd.f32 %v209, %v537
    %v541 = vtanh.pop %v540
    %s542 = scalar_lea.vmem [#allocation2], 24
    %543 = vst [vmem:[%s542] sm:$0xff] %v541
    %544 = vmatprep.subr.mxu0 0.0
    %545 = vmatpush1.msra.mxu0 %v232
    %546 = vmatprep.subr.mxu0 0.0
    %547 = vmatpush1.msra.mxu0 %v233
    %548 = vmatprep.subr.mxu0 0.0
    %549 = vmatpush1.msra.mxu0 %v234
    %550 = vmatprep.subr.mxu0 0.0
    %551 = vmatpush1.msra.mxu0 %v235
    %552 = vmatprep.subr.mxu0 0.0
    %553 = vmatpush1.msra.mxu0 %v236
    %554 = vmatprep.subr.mxu0 0.0
    %555 = vmatpush1.msra.mxu0 %v237
    %556 = vmatprep.subr.mxu0 0.0
    %557 = vmatpush1.msra.mxu0 %v238
    %558 = vmatprep.subr.mxu0 0.0
    %559 = vmatpush1.msra.mxu0 %v239
    %560 = vmatprep.subr.mxu0 0.0
    %561 = vmatpush1.msra.mxu0 %v240
    %562 = vmatprep.subr.mxu0 0.0
    %563 = vmatpush1.msra.mxu0 %v241
    %564 = vmatprep.subr.mxu0 0.0
    %565 = vmatpush1.msra.mxu0 %v242
    %566 = vmatprep.subr.mxu0 0.0
    %567 = vmatpush1.msra.mxu0 %v243
    %568 = vmatprep.subr.mxu0 0.0
    %569 = vmatpush1.msra.mxu0 %v244
    %570 = vmatprep.subr.mxu0 0.0
    %571 = vmatpush1.msra.mxu0 %v245
    %572 = vmatprep.subr.mxu0 0.0
    %573 = vmatpush1.msra.mxu0 %v246
    %574 = vmatprep.subr.mxu0 0.0
    %575 = vmatpush1.msra.mxu0 %v247
    %576 = vmatprep.subr.mxu0 0.0
    %577 = vmatpush1.msra.mxu0 0.0
    %578 = vmatprep.subr.mxu0 0.0
    %579 = vmatpush1.msra.mxu0 0.0
    %580 = vmatprep.subr.mxu0 0.0
    %581 = vmatpush1.msra.mxu0 0.0
    %582 = vmatprep.subr.mxu0 0.0
    %583 = vmatpush1.msra.mxu0 0.0
    %584 = vmatprep.subr.mxu0 0.0
    %585 = vmatpush1.msra.mxu0 0.0
    %586 = vmatprep.subr.mxu0 0.0
    %587 = vmatpush1.msra.mxu0 0.0
    %588 = vmatprep.subr.mxu0 0.0
    %589 = vmatpush1.msra.mxu0 0.0
    %590 = vmatprep.subr.mxu0 0.0
    %591 = vmatpush1.msra.mxu0 0.0
    %592 = vmatprep.subr.mxu0 0.0
    %593 = vmatpush1.msra.mxu0 0.0
    %594 = vmatprep.subr.mxu0 0.0
    %595 = vmatpush1.msra.mxu0 0.0
    %596 = vmatprep.subr.mxu0 0.0
    %597 = vmatpush1.msra.mxu0 0.0
    %598 = vmatprep.subr.mxu0 0.0
    %599 = vmatpush1.msra.mxu0 0.0
    %600 = vmatprep.subr.mxu0 0.0
    %601 = vmatpush1.msra.mxu0 0.0
    %602 = vmatprep.subr.mxu0 0.0
    %603 = vmatpush1.msra.mxu0 0.0
    %604 = vmatprep.subr.mxu0 0.0
    %605 = vmatpush1.msra.mxu0 0.0
    %606 = vmatprep.subr.mxu0 0.0
    %607 = vmatpush1.msra.mxu0 0.0
    %608 = vmatprep.mubr.f32.mxu0 0.0
    %609 = vmatmul.mubr.f32.gmra.mrb[0].mxu0 %v541
    %v610 = vpop.f32.mrb[0].mxu0
    %v611 = vadd.f32 0.0, %v610
    %v612 = vpop.f32.mrb[0].mxu0
    %613 = vdwg.mxu0
    %v614 = vadd.f32 %v214, %v611
    %v615 = vtanh.pop %v614
    %s616 = scalar_lea.vmem [#allocation2], 32
    %617 = vst [vmem:[%s616] sm:$0xff] %v615
    %618 = vmatprep.subr.mxu0 0.0
    %619 = vmatpush1.msra.mxu0 %v232
    %620 = vmatprep.subr.mxu0 0.0
    %621 = vmatpush1.msra.mxu0 %v233
    %622 = vmatprep.subr.mxu0 0.0
    %623 = vmatpush1.msra.mxu0 %v234
    %624 = vmatprep.subr.mxu0 0.0
    %625 = vmatpush1.msra.mxu0 %v235
    %626 = vmatprep.subr.mxu0 0.0
    %627 = vmatpush1.msra.mxu0 %v236
    %628 = vmatprep.subr.mxu0 0.0
    %629 = vmatpush1.msra.mxu0 %v237
    %630 = vmatprep.subr.mxu0 0.0
    %631 = vmatpush1.msra.mxu0 %v238
    %632 = vmatprep.subr.mxu0 0.0
    %633 = vmatpush1.msra.mxu0 %v239
    %634 = vmatprep.subr.mxu0 0.0
    %635 = vmatpush1.msra.mxu0 %v240
    %636 = vmatprep.subr.mxu0 0.0
    %637 = vmatpush1.msra.mxu0 %v241
    %638 = vmatprep.subr.mxu0 0.0
    %639 = vmatpush1.msra.mxu0 %v242
    %640 = vmatprep.subr.mxu0 0.0
    %641 = vmatpush1.msra.mxu0 %v243
    %642 = vmatprep.subr.mxu0 0.0
    %643 = vmatpush1.msra.mxu0 %v244
    %644 = vmatprep.subr.mxu0 0.0
    %645 = vmatpush1.msra.mxu0 %v245
    %646 = vmatprep.subr.mxu0 0.0
    %647 = vmatpush1.msra.mxu0 %v246
    %648 = vmatprep.subr.mxu0 0.0
    %649 = vmatpush1.msra.mxu0 %v247
    %650 = vmatprep.subr.mxu0 0.0
    %651 = vmatpush1.msra.mxu0 0.0
    %652 = vmatprep.subr.mxu0 0.0
    %653 = vmatpush1.msra.mxu0 0.0
    %654 = vmatprep.subr.mxu0 0.0
    %655 = vmatpush1.msra.mxu0 0.0
    %656 = vmatprep.subr.mxu0 0.0
    %657 = vmatpush1.msra.mxu0 0.0
    %658 = vmatprep.subr.mxu0 0.0
    %659 = vmatpush1.msra.mxu0 0.0
    %660 = vmatprep.subr.mxu0 0.0
    %661 = vmatpush1.msra.mxu0 0.0
    %662 = vmatprep.subr.mxu0 0.0
    %663 = vmatpush1.msra.mxu0 0.0
    %664 = vmatprep.subr.mxu0 0.0
    %665 = vmatpush1.msra.mxu0 0.0
    %666 = vmatprep.subr.mxu0 0.0
    %667 = vmatpush1.msra.mxu0 0.0
    %668 = vmatprep.subr.mxu0 0.0
    %669 = vmatpush1.msra.mxu0 0.0
    %670 = vmatprep.subr.mxu0 0.0
    %671 = vmatpush1.msra.mxu0 0.0
    %672 = vmatprep.subr.mxu0 0.0
    %673 = vmatpush1.msra.mxu0 0.0
    %674 = vmatprep.subr.mxu0 0.0
    %675 = vmatpush1.msra.mxu0 0.0
    %676 = vmatprep.subr.mxu0 0.0
    %677 = vmatpush1.msra.mxu0 0.0
    %678 = vmatprep.subr.mxu0 0.0
    %679 = vmatpush1.msra.mxu0 0.0
    %680 = vmatprep.subr.mxu0 0.0
    %681 = vmatpush1.msra.mxu0 0.0
    %682 = vmatprep.mubr.f32.mxu0 0.0
    %683 = vmatmul.mubr.f32.gmra.mrb[0].mxu0 %v615
    %v684 = vpop.f32.mrb[0].mxu0
    %v685 = vadd.f32 0.0, %v684
    %v686 = vpop.f32.mrb[0].mxu0
    %687 = vdwg.mxu0
    %v688 = vadd.f32 %v219, %v685
    %v689 = vtanh.pop %v688
    %s690 = scalar_lea.vmem [#allocation2], 40
    %691 = vst [vmem:[%s690] sm:$0xff] %v689
    %692 = vmatprep.subr.mxu0 0.0
    %693 = vmatpush1.msra.mxu0 %v232
    %694 = vmatprep.subr.mxu0 0.0
    %695 = vmatpush1.msra.mxu0 %v233
    %696 = vmatprep.subr.mxu0 0.0
    %697 = vmatpush1.msra.mxu0 %v234
    %698 = vmatprep.subr.mxu0 0.0
    %699 = vmatpush1.msra.mxu0 %v235
    %700 = vmatprep.subr.mxu0 0.0
    %701 = vmatpush1.msra.mxu0 %v236
    %702 = vmatprep.subr.mxu0 0.0
    %703 = vmatpush1.msra.mxu0 %v237
    %704 = vmatprep.subr.mxu0 0.0
    %705 = vmatpush1.msra.mxu0 %v238
    %706 = vmatprep.subr.mxu0 0.0
    %707 = vmatpush1.msra.mxu0 %v239
    %708 = vmatprep.subr.mxu0 0.0
    %709 = vmatpush1.msra.mxu0 %v240
    %710 = vmatprep.subr.mxu0 0.0
    %711 = vmatpush1.msra.mxu0 %v241
    %712 = vmatprep.subr.mxu0 0.0
    %713 = vmatpush1.msra.mxu0 %v242
    %714 = vmatprep.subr.mxu0 0.0
    %715 = vmatpush1.msra.mxu0 %v243
    %716 = vmatprep.subr.mxu0 0.0
    %717 = vmatpush1.msra.mxu0 %v244
    %718 = vmatprep.subr.mxu0 0.0
    %719 = vmatpush1.msra.mxu0 %v245
    %720 = vmatprep.subr.mxu0 0.0
    %721 = vmatpush1.msra.mxu0 %v246
    %722 = vmatprep.subr.mxu0 0.0
    %723 = vmatpush1.msra.mxu0 %v247
    %724 = vmatprep.subr.mxu0 0.0
    %725 = vmatpush1.msra.mxu0 0.0
    %726 = vmatprep.subr.mxu0 0.0
    %727 = vmatpush1.msra.mxu0 0.0
    %728 = vmatprep.subr.mxu0 0.0
    %729 = vmatpush1.msra.mxu0 0.0
    %730 = vmatprep.subr.mxu0 0.0
    %731 = vmatpush1.msra.mxu0 0.0
    %732 = vmatprep.subr.mxu0 0.0
    %733 = vmatpush1.msra.mxu0 0.0
    %734 = vmatprep.subr.mxu0 0.0
    %735 = vmatpush1.msra.mxu0 0.0
    %736 = vmatprep.subr.mxu0 0.0
    %737 = vmatpush1.msra.mxu0 0.0
    %738 = vmatprep.subr.mxu0 0.0
    %739 = vmatpush1.msra.mxu0 0.0
    %740 = vmatprep.subr.mxu0 0.0
    %741 = vmatpush1.msra.mxu0 0.0
    %742 = vmatprep.subr.mxu0 0.0
    %743 = vmatpush1.msra.mxu0 0.0
    %744 = vmatprep.subr.mxu0 0.0
    %745 = vmatpush1.msra.mxu0 0.0
    %746 = vmatprep.subr.mxu0 0.0
    %747 = vmatpush1.msra.mxu0 0.0
    %748 = vmatprep.subr.mxu0 0.0
    %749 = vmatpush1.msra.mxu0 0.0
    %750 = vmatprep.subr.mxu0 0.0
    %751 = vmatpush1.msra.mxu0 0.0
    %752 = vmatprep.subr.mxu0 0.0
    %753 = vmatpush1.msra.mxu0 0.0
    %754 = vmatprep.subr.mxu0 0.0
    %755 = vmatpush1.msra.mxu0 0.0
    %756 = vmatprep.mubr.f32.mxu0 0.0
    %757 = vmatmul.mubr.f32.gmra.mrb[0].mxu0 %v689
    %v758 = vpop.f32.mrb[0].mxu0
    %v759 = vadd.f32 0.0, %v758
    %v760 = vpop.f32.mrb[0].mxu0
    %761 = vdwg.mxu0
    %v762 = vadd.f32 %v224, %v759
    %v763 = vtanh.pop %v762
    %s764 = scalar_lea.vmem [#allocation2], 48
    %765 = vst [vmem:[%s764] sm:$0xff] %v763
    %766 = vmatprep.subr.mxu0 0.0
    %767 = vmatpush1.msra.mxu0 %v232
    %768 = vmatprep.subr.mxu0 0.0
    %769 = vmatpush1.msra.mxu0 %v233
    %770 = vmatprep.subr.mxu0 0.0
    %771 = vmatpush1.msra.mxu0 %v234
    %772 = vmatprep.subr.mxu0 0.0
    %773 = vmatpush1.msra.mxu0 %v235
    %774 = vmatprep.subr.mxu0 0.0
    %775 = vmatpush1.msra.mxu0 %v236
    %776 = vmatprep.subr.mxu0 0.0
    %777 = vmatpush1.msra.mxu0 %v237
    %778 = vmatprep.subr.mxu0 0.0
    %779 = vmatpush1.msra.mxu0 %v238
    %780 = vmatprep.subr.mxu0 0.0
    %781 = vmatpush1.msra.mxu0 %v239
    %782 = vmatprep.subr.mxu0 0.0
    %783 = vmatpush1.msra.mxu0 %v240
    %784 = vmatprep.subr.mxu0 0.0
    %785 = vmatpush1.msra.mxu0 %v241
    %786 = vmatprep.subr.mxu0 0.0
    %787 = vmatpush1.msra.mxu0 %v242
    %788 = vmatprep.subr.mxu0 0.0
    %789 = vmatpush1.msra.mxu0 %v243
    %790 = vmatprep.subr.mxu0 0.0
    %791 = vmatpush1.msra.mxu0 %v244
    %792 = vmatprep.subr.mxu0 0.0
    %793 = vmatpush1.msra.mxu0 %v245
    %794 = vmatprep.subr.mxu0 0.0
    %795 = vmatpush1.msra.mxu0 %v246
    %796 = vmatprep.subr.mxu0 0.0
    %797 = vmatpush1.msra.mxu0 %v247
    %798 = vmatprep.subr.mxu0 0.0
    %799 = vmatpush1.msra.mxu0 0.0
    %800 = vmatprep.subr.mxu0 0.0
    %801 = vmatpush1.msra.mxu0 0.0
    %802 = vmatprep.subr.mxu0 0.0
    %803 = vmatpush1.msra.mxu0 0.0
    %804 = vmatprep.subr.mxu0 0.0
    %805 = vmatpush1.msra.mxu0 0.0
    %806 = vmatprep.subr.mxu0 0.0
    %807 = vmatpush1.msra.mxu0 0.0
    %808 = vmatprep.subr.mxu0 0.0
    %809 = vmatpush1.msra.mxu0 0.0
    %810 = vmatprep.subr.mxu0 0.0
    %811 = vmatpush1.msra.mxu0 0.0
    %812 = vmatprep.subr.mxu0 0.0
    %813 = vmatpush1.msra.mxu0 0.0
    %814 = vmatprep.subr.mxu0 0.0
    %815 = vmatpush1.msra.mxu0 0.0
    %816 = vmatprep.subr.mxu0 0.0
    %817 = vmatpush1.msra.mxu0 0.0
    %818 = vmatprep.subr.mxu0 0.0
    %819 = vmatpush1.msra.mxu0 0.0
    %820 = vmatprep.subr.mxu0 0.0
    %821 = vmatpush1.msra.mxu0 0.0
    %822 = vmatprep.subr.mxu0 0.0
    %823 = vmatpush1.msra.mxu0 0.0
    %824 = vmatprep.subr.mxu0 0.0
    %825 = vmatpush1.msra.mxu0 0.0
    %826 = vmatprep.subr.mxu0 0.0
    %827 = vmatpush1.msra.mxu0 0.0
    %828 = vmatprep.subr.mxu0 0.0
    %829 = vmatpush1.msra.mxu0 0.0
    %830 = vmatprep.mubr.f32.mxu0 0.0
    %831 = vmatmul.mubr.f32.gmra.mrb[0].mxu0 %v763
    %v832 = vpop.f32.mrb[0].mxu0
    %v833 = vadd.f32 0.0, %v832
    %v834 = vpop.f32.mrb[0].mxu0
    %835 = vdwg.mxu0
    %v836 = vadd.f32 %v229, %v833
    %v837 = vtanh.pop %v836
    %s838 = scalar_lea.vmem [#allocation2], 56
    %839 = vst [vmem:[%s838] sm:$0xff] %v837
    %840 = vst [vmem:[#allocation13] sm:$0xff] %v837
    %v841 = vld [vmem:[#allocation2] sm:$0xff]
    %v842 = vld [vmem:[#allocation2 + $0x8] sm:$0xff]
    %v843 = vld [vmem:[#allocation2 + $0x10] sm:$0xff]
    %v844 = vld [vmem:[#allocation2 + $0x18] sm:$0xff]
    %v845 = vld [vmem:[#allocation2 + $0x20] sm:$0xff]
    %v846 = vld [vmem:[#allocation2 + $0x28] sm:$0xff]
    %v847 = vld [vmem:[#allocation2 + $0x30] sm:$0xff]
    %v848 = vld [vmem:[#allocation2 + $0x38] sm:$0xff]
    %v849 = vld [vmem:[#allocation11] sm:$0xff]
    %v850 = vld [vmem:[#allocation11 + $0x8] sm:$0xff]
    %v851 = vld [vmem:[#allocation11 + $0x10] sm:$0xff]
    %v852 = vld [vmem:[#allocation11 + $0x18] sm:$0xff]
    %v853 = vld [vmem:[#allocation11 + $0x20] sm:$0xff]
    %v854 = vld [vmem:[#allocation11 + $0x28] sm:$0xff]
    %v855 = vld [vmem:[#allocation11 + $0x30] sm:$0xff]
    %v856 = vld [vmem:[#allocation11 + $0x38] sm:$0xff]
    %v857 = vld [vmem:[#allocation11 + $0x40] sm:$0xff]
    %v858 = vld [vmem:[#allocation11 + $0x48] sm:$0xff]
    %v859 = vld [vmem:[#allocation11 + $0x50] sm:$0xff]
    %v860 = vld [vmem:[#allocation11 + $0x58] sm:$0xff]
    %v861 = vld [vmem:[#allocation11 + $0x60] sm:$0xff]
    %v862 = vld [vmem:[#allocation11 + $0x68] sm:$0xff]
    %v863 = vld [vmem:[#allocation11 + $0x70] sm:$0xff]
    %v864 = vld [vmem:[#allocation11 + $0x78] sm:$0xff]
    %v865 = vld [vmem:[%s6] sm:$0x1]
    %v867 = vlaneseq
    %v868 = vshrl.u32 %v867, 7
    %v869 = vsub.s32 0, %v868
    %v870 = vrot.slane %v865, %v869
    %872 = vmatprep.subr.mxu0 0.0
    %873 = vmatpush1.msra.mxu0 %v849
    %874 = vmatprep.subr.mxu0 0.0
    %875 = vmatpush1.msra.mxu0 %v850
    %876 = vmatprep.subr.mxu0 0.0
    %877 = vmatpush1.msra.mxu0 %v851
    %878 = vmatprep.subr.mxu0 0.0
    %879 = vmatpush1.msra.mxu0 %v852
    %880 = vmatprep.subr.mxu0 0.0
    %881 = vmatpush1.msra.mxu0 %v853
    %882 = vmatprep.subr.mxu0 0.0
    %883 = vmatpush1.msra.mxu0 %v854
    %884 = vmatprep.subr.mxu0 0.0
    %885 = vmatpush1.msra.mxu0 %v855
    %886 = vmatprep.subr.mxu0 0.0
    %887 = vmatpush1.msra.mxu0 %v856
    %888 = vmatprep.subr.mxu0 0.0
    %889 = vmatpush1.msra.mxu0 %v857
    %890 = vmatprep.subr.mxu0 0.0
    %891 = vmatpush1.msra.mxu0 %v858
    %892 = vmatprep.subr.mxu0 0.0
    %893 = vmatpush1.msra.mxu0 %v859
    %894 = vmatprep.subr.mxu0 0.0
    %895 = vmatpush1.msra.mxu0 %v860
    %896 = vmatprep.subr.mxu0 0.0
    %897 = vmatpush1.msra.mxu0 %v861
    %898 = vmatprep.subr.mxu0 0.0
    %899 = vmatpush1.msra.mxu0 %v862
    %900 = vmatprep.subr.mxu0 0.0
    %901 = vmatpush1.msra.mxu0 %v863
    %902 = vmatprep.subr.mxu0 0.0
    %903 = vmatpush1.msra.mxu0 %v864
    %904 = vmatprep.subr.mxu0 0.0
    %905 = vmatpush1.msra.mxu0 0.0
    %906 = vmatprep.subr.mxu0 0.0
    %907 = vmatpush1.msra.mxu0 0.0
    %908 = vmatprep.subr.mxu0 0.0
    %909 = vmatpush1.msra.mxu0 0.0
    %910 = vmatprep.subr.mxu0 0.0
    %911 = vmatpush1.msra.mxu0 0.0
    %912 = vmatprep.subr.mxu0 0.0
    %913 = vmatpush1.msra.mxu0 0.0
    %914 = vmatprep.subr.mxu0 0.0
    %915 = vmatpush1.msra.mxu0 0.0
    %916 = vmatprep.subr.mxu0 0.0
    %917 = vmatpush1.msra.mxu0 0.0
    %918 = vmatprep.subr.mxu0 0.0
    %919 = vmatpush1.msra.mxu0 0.0
    %920 = vmatprep.subr.mxu0 0.0
    %921 = vmatpush1.msra.mxu0 0.0
    %922 = vmatprep.subr.mxu0 0.0
    %923 = vmatpush1.msra.mxu0 0.0
    %924 = vmatprep.subr.mxu0 0.0
    %925 = vmatpush1.msra.mxu0 0.0
    %926 = vmatprep.subr.mxu0 0.0
    %927 = vmatpush1.msra.mxu0 0.0
    %928 = vmatprep.subr.mxu0 0.0
    %929 = vmatpush1.msra.mxu0 0.0
    %930 = vmatprep.subr.mxu0 0.0
    %931 = vmatpush1.msra.mxu0 0.0
    %932 = vmatprep.subr.mxu0 0.0
    %933 = vmatpush1.msra.mxu0 0.0
    %934 = vmatprep.subr.mxu0 0.0
    %935 = vmatpush1.msra.mxu0 0.0
    %936 = vmatprep.mubr.f32.mxu0 0.0
    %937 = vmatmul.mubr.f32.gmra.mrb[0].mxu0 %v841
    %v938 = vpop.f32.mrb[0].mxu0
    %v939 = vadd.f32 %v870, %v938
    %v940 = vpop.f32.mrb[0].mxu0
    %941 = vmatprep.mubr.f32.mxu0 0.0
    %942 = vmatmul.mubr.f32.gmra.mrb[0].mxu0 %v842
    %v943 = vpop.f32.mrb[0].mxu0
    %v944 = vadd.f32 %v870, %v943
    %v945 = vpop.f32.mrb[0].mxu0
    %946 = vmatprep.mubr.f32.mxu0 0.0
    %947 = vmatmul.mubr.f32.gmra.mrb[0].mxu0 %v843
    %v948 = vpop.f32.mrb[0].mxu0
    %v949 = vadd.f32 %v870, %v948
    %v950 = vpop.f32.mrb[0].mxu0
    %951 = vmatprep.mubr.f32.mxu0 0.0
    %952 = vmatmul.mubr.f32.gmra.mrb[0].mxu0 %v844
    %v953 = vpop.f32.mrb[0].mxu0
    %v954 = vadd.f32 %v870, %v953
    %v955 = vpop.f32.mrb[0].mxu0
    %956 = vmatprep.mubr.f32.mxu0 0.0
    %957 = vmatmul.mubr.f32.gmra.mrb[0].mxu0 %v845
    %v958 = vpop.f32.mrb[0].mxu0
    %v959 = vadd.f32 %v870, %v958
    %v960 = vpop.f32.mrb[0].mxu0
    %961 = vmatprep.mubr.f32.mxu0 0.0
    %962 = vmatmul.mubr.f32.gmra.mrb[0].mxu0 %v846
    %v963 = vpop.f32.mrb[0].mxu0
    %v964 = vadd.f32 %v870, %v963
    %v965 = vpop.f32.mrb[0].mxu0
    %966 = vmatprep.mubr.f32.mxu0 0.0
    %967 = vmatmul.mubr.f32.gmra.mrb[0].mxu0 %v847
    %v968 = vpop.f32.mrb[0].mxu0
    %v969 = vadd.f32 %v870, %v968
    %v970 = vpop.f32.mrb[0].mxu0
    %971 = vmatprep.mubr.f32.mxu0 0.0
    %972 = vmatmul.mubr.f32.gmra.mrb[0].mxu0 %v848
    %v973 = vpop.f32.mrb[0].mxu0
    %v974 = vadd.f32 %v870, %v973
    %v975 = vpop.f32.mrb[0].mxu0
    %976 = vdwg.mxu0
    %977 = vst [vmem:[#allocation12] sm:$0xff] %v939
    %978 = vst [vmem:[#allocation12 + $0x8] sm:$0xff] %v944
    %979 = vst [vmem:[#allocation12 + $0x10] sm:$0xff] %v949
    %980 = vst [vmem:[#allocation12 + $0x18] sm:$0xff] %v954
    %981 = vst [vmem:[#allocation12 + $0x20] sm:$0xff] %v959
    %982 = vst [vmem:[#allocation12 + $0x28] sm:$0xff] %v964
    %983 = vst [vmem:[#allocation12 + $0x30] sm:$0xff] %v969
    %984 = vst [vmem:[#allocation12 + $0x38] sm:$0xff] %v974
    // Predicated region
    $region50: #{tpu_custom_call.1} parent=1 // pred_check
      _
    $region51: #{tpu_custom_call.1} parent=1 // pred_check_branch
      %986 = sbr.rel (0) target = $region53
    $region52: #{tpu_custom_call.1} parent=1 // pred_region
      %s988 = ssub.s32 1024, 1024
      %989 = vsyncadd [#allocation5], %s988
      %s990 = sshll.u32 [#allocation12], 4
      %s991 = int_to_ptr.vmem [resolvable:$true] %s990
      %996 = dma.vmem_to_hbm [thread:$0]  %s991, 1024, %s7, [#allocation5], 128, 128, 8
    $region53: #{tpu_custom_call.1} parent=1 // pred_fallthru
      _
    // Predicated region
    $region54: #{tpu_custom_call.1} parent=1 // pred_check
      _
    $region55: #{tpu_custom_call.1} parent=1 // pred_check_branch
      %998 = sbr.rel (0) target = $region57
    $region56: #{tpu_custom_call.1} parent=1 // pred_region
      %s1000 = ssub.s32 128, 128
      %1001 = vsyncadd [#allocation14], %s1000
      %s1003 = sshll.u32 [#allocation13], 4
      %s1004 = int_to_ptr.vmem [resolvable:$true] %s1003
      %1006 = dma.vmem_to_hbm [thread:$0]  %s1004, 128, %s8, [#allocation14]
    $region57: #{tpu_custom_call.1} parent=1 // pred_fallthru
      _
    // Predicated region
    $region58: #{tpu_custom_call.1} parent=1 // pred_check
      _
    $region59: #{tpu_custom_call.1} parent=1 // pred_check_branch
      %1008 = sbr.rel (0) target = $region61
    $region60: #{tpu_custom_call.1} parent=1 // pred_region
      %1009 = dma.done [#allocation5], 1024
    $region61: #{tpu_custom_call.1} parent=1 // pred_fallthru
      _
    // Predicated region
    $region62: #{tpu_custom_call.1} parent=1 // pred_check
      _
    $region63: #{tpu_custom_call.1} parent=1 // pred_check_branch
      %1011 = sbr.rel (0) target = $region65
    $region64: #{tpu_custom_call.1} parent=1 // pred_region
      %1012 = dma.done [#allocation14], 128
    $region65: #{tpu_custom_call.1} parent=1 // pred_fallthru
      _
    %1013 = vsyncpa [#allocation4], 1
    %1014 = vsyncpa [#allocation7], 1
    %1015 = vsyncpa [#allocation10], 1
    %1016 = vsyncpa [#allocation5], 1
    %1017 = vsyncpa [#allocation14], 1

</llo_original>
